<compile_context>
chip_gen: v5e
topology: v5e:2x2
jax: 0.10.0
libtpu: 0.0.40
codegen_flags: <defaults>
</compile_context>

<pallas_src>
import math

import jax
import jax.numpy as jnp
from jax.experimental import pallas as pl
from jax.experimental.pallas import tpu as pltpu

FEAT_PAD = 128   # padded hidden lane width (64/128 hidden units -> 128 lanes)
OUT_PAD = 8      # padded output lane width (n_actions=5 -> 8 lanes)


# ----------------------------- Pallas kernel ------------------------------ #
def qnet_kernel(x_ref, w1_ref, wh_ref, w5_ref, bh_ref, b5_ref, o_ref):
    # Layer 1: (tb, in_dims) @ (in_dims, 128) -> (tb, 128), f32 (K is tiny).
    # Real outputs in lanes 0..63; padded lanes stay exactly zero because the
    # padded W1 columns and bias lanes are zero (and ReLU(0) = 0).
    h = jnp.dot(x_ref[...], w1_ref[...], preferred_element_type=jnp.float32)
    h = jnp.maximum(h + bh_ref[0:1, :], 0.0)

    # Layers 2..4: bf16 MXU matmuls with f32 accumulation; f32 bias + ReLU.
    for i in range(3):
        h = jnp.dot(h.astype(jnp.bfloat16), wh_ref[i],
                    preferred_element_type=jnp.float32)
        h = jnp.maximum(h + bh_ref[i + 1:i + 2, :], 0.0)

    # Layer 5 (no ReLU): narrow (tb, 8) output; real Q-values in lanes
    # 0..n_actions-1, padded lanes exactly zero.
    out = jnp.dot(h.astype(jnp.bfloat16), w5_ref[...],
                  preferred_element_type=jnp.float32) + b5_ref[...]
    o_ref[...] = out.astype(o_ref.dtype)


# ------------------------------ Packing ----------------------------------- #
def _round_up(n, m):
    return ((n + m - 1) // m) * m


def pack_qnet_params(params):
    """Pack the 5 (W, b) pairs into VMEM-resident slabs (do this once).

    Returns:
      w1p: (in_dims, 128) f32
      wh : (3, 128, 128)  bf16  (layers 2..4, zero-padded)
      w5p: (128, 8)       bf16  (layer 5, zero-padded)
      bh : (4, 128)       f32   (biases 1..4, zero-padded)
      b5p: (1, 8)         f32   (bias 5, zero-padded)
    """
    assert len(params) == 5
    (w1, b1), (w2, b2), (w3, b3), (w4, b4), (w5, b5) = params
    in_dims = w1.shape[0]

    w1p = jnp.zeros((in_dims, FEAT_PAD), jnp.float32).at[:, :w1.shape[1]].set(w1)

    wh = jnp.zeros((3, FEAT_PAD, FEAT_PAD), jnp.float32)
    for i, w in enumerate((w2, w3, w4)):
        wh = wh.at[i, :w.shape[0], :w.shape[1]].set(w)
    wh = wh.astype(jnp.bfloat16)

    w5p = (jnp.zeros((FEAT_PAD, OUT_PAD), jnp.float32)
           .at[:w5.shape[0], :w5.shape[1]].set(w5)
           .astype(jnp.bfloat16))

    bh = jnp.zeros((4, FEAT_PAD), jnp.float32)
    for i, b in enumerate((b1, b2, b3, b4)):
        bh = bh.at[i, :b.shape[0]].set(b)

    b5p = jnp.zeros((1, OUT_PAD), jnp.float32).at[0, :b5.shape[0]].set(b5)
    return w1p, wh, w5p, bh, b5p


# ------------------------------ Wrapper ------------------------------------ #
def qnet_forward(x, packed_params, *, n_actions=5, tb=4096):
    """x: (B, input_dims) float32; packed_params from pack_qnet_params."""
    w1p, wh, w5p, bh, b5p = packed_params
    B, in_dims = x.shape
    assert in_dims == w1p.shape[0]
    assert n_actions <= OUT_PAD

    # Large tile to amortize per-step overhead, clamped to ceil(B/2) (rounded
    # to a sublane multiple) so the grid has >= 2 steps whenever B > 8 and
    # both TensorCores get work on v7x.  Always a multiple of 8.
    tb = max(8, min(tb, _round_up(-(-B // 2), 8)))
    grid_n = -(-B // tb)            # cdiv
    b_pad = grid_n * tb

    # Pad the batch dim only when needed (keeps out-of-range rows defined).
    x_in = x if b_pad == B else jnp.pad(x, ((0, b_pad - B), (0, 0)))

    flops = 2 * B * (in_dims * 64 + 64 * 128 + 128 * 128 + 128 * 64
                     + 64 * n_actions)
    bytes_accessed = (x_in.size * 4 + w1p.size * 4 + wh.size * 2
                      + w5p.size * 2 + bh.size * 4 + b5p.size * 4
                      + b_pad * OUT_PAD * 4)

    out_padded = pl.pallas_call(
        qnet_kernel,
        out_shape=jax.ShapeDtypeStruct((b_pad, OUT_PAD), jnp.float32),
        grid=(grid_n,),
        in_specs=[
            # activations: tiled over the batch grid, feature dim unpadded
            pl.BlockSpec((tb, in_dims), lambda i: (i, 0)),
            # weights/biases: constant block index -> DMA'd once, VMEM-resident
            pl.BlockSpec((in_dims, FEAT_PAD), lambda i: (0, 0)),
            pl.BlockSpec((3, FEAT_PAD, FEAT_PAD), lambda i: (0, 0, 0)),
            pl.BlockSpec((FEAT_PAD, OUT_PAD), lambda i: (0, 0)),
            pl.BlockSpec((4, FEAT_PAD), lambda i: (0, 0)),
            pl.BlockSpec((1, OUT_PAD), lambda i: (0, 0)),
        ],
        out_specs=pl.BlockSpec((tb, OUT_PAD), lambda i: (i, 0)),
        compiler_params=pltpu.CompilerParams(
            dimension_semantics=("parallel",)),
        cost_estimate=pl.CostEstimate(
            flops=flops, transcendentals=0, bytes_accessed=bytes_accessed),
    )(x_in, w1p, wh, w5p, bh, b5p)

    # Cheap now (8-lane rows): drop batch padding + padded action lanes.
    return out_padded[:B, :n_actions]


# ----------------------- Deterministic parameter init ---------------------- #
def xavier_uniform(key, fan_in, fan_out, gain=0.01):
    # Matches torch.nn.init.xavier_uniform_: U(-a, a), a = gain*sqrt(6/(fi+fo))
    a = gain * math.sqrt(6.0 / (fan_in + fan_out))
    return jax.random.uniform(key, (fan_in, fan_out), jnp.float32,
                              minval=-a, maxval=a)


def init_qnet_params(key, input_dims=6, n_actions=5):
    dims = [input_dims, 64, 128, 128, 64, n_actions]
    params = []
    for i in range(len(dims) - 1):
        key, sub = jax.random.split(key)
        w = xavier_uniform(sub, dims[i], dims[i + 1], gain=0.01)
        b = jnp.full((dims[i + 1],), 0.01, dtype=jnp.float32)
        params.append((w, b))
    return params


# Plain-JAX f32 reference.
def qnet_reference(x, params):
    h = x
    for i, (w, b) in enumerate(params):
        h = h @ w + b
        if i < len(params) - 1:
            h = jnp.maximum(h, 0.0)
    return h


if __name__ == "__main__":
    key = jax.random.PRNGKey(0)
    k_param, k_x, k_x2 = jax.random.split(key, 3)

    input_dims, n_actions, batch = 6, 5, 8
    params = init_qnet_params(k_param, input_dims=input_dims,
                              n_actions=n_actions)
    packed = pack_qnet_params(params)

    # Small batch: single grid step.
    x = jax.random.normal(k_x, (batch, input_dims), dtype=jnp.float32)
    out = qnet_forward(x, packed, n_actions=n_actions)
    jax.block_until_ready(out)
    ref = qnet_reference(x, params)
    assert out.shape == (batch, n_actions)
    # bf16 hidden matmuls (f32 accumulate) -> relaxed tolerance vs f32 ref.
    assert jnp.allclose(out, ref, atol=2e-3, rtol=2e-2), \
        float(jnp.max(jnp.abs(out - ref)))

    # Non-multiple batch with a small forced tile: exercises the batch grid,
    # padding path and multi-step ("parallel") pipelining.
    x2 = jax.random.normal(k_x2, (200, input_dims), dtype=jnp.float32)
    out2 = qnet_forward(x2, packed, n_actions=n_actions, tb=64)
    jax.block_until_ready(out2)
    ref2 = qnet_reference(x2, params)
    assert out2.shape == (200, n_actions)
    assert jnp.allclose(out2, ref2, atol=2e-3, rtol=2e-2), \
        float(jnp.max(jnp.abs(out2 - ref2)))

    print("KERNEL_OK")
</pallas_src>

<mosaic_0001>
module attributes {stable_mosaic.version = 11 : i64} {
  func.func @qnet_kernel(%arg0: i32, %arg1: memref<8x6xf32, #tpu.memory_space<vmem>>, %arg2: memref<6x128xf32, #tpu.memory_space<vmem>>, %arg3: memref<3x128x128xbf16, #tpu.memory_space<vmem>>, %arg4: memref<128x8xbf16, #tpu.memory_space<vmem>>, %arg5: memref<4x128xf32, #tpu.memory_space<vmem>>, %arg6: memref<1x8xf32, #tpu.memory_space<vmem>>, %arg7: memref<8x8xf32, #tpu.memory_space<vmem>>) attributes {dimension_semantics = [#tpu.dimension_semantics<parallel>], iteration_bounds = array<i64: 1>, scalar_prefetch = 0 : i64, scratch_operands = 0 : i64, tpu.core_type = #tpu.core_type<tc>, window_params = [{transform_indices = @transform_0, window_bounds = array<i64: 8, 6>}, {pipeline_mode = #tpu.pipeline_mode<synchronous>, transform_indices = @transform_1, window_bounds = array<i64: 6, 128>}, {pipeline_mode = #tpu.pipeline_mode<synchronous>, transform_indices = @transform_2, window_bounds = array<i64: 3, 128, 128>}, {pipeline_mode = #tpu.pipeline_mode<synchronous>, transform_indices = @transform_3, window_bounds = array<i64: 128, 8>}, {pipeline_mode = #tpu.pipeline_mode<synchronous>, transform_indices = @transform_4, window_bounds = array<i64: 4, 128>}, {pipeline_mode = #tpu.pipeline_mode<synchronous>, transform_indices = @transform_5, window_bounds = array<i64: 1, 8>}, {transform_indices = @transform_6, window_bounds = array<i64: 8, 8>}]} {
    %c0 = arith.constant 0 : index
    %c0_0 = arith.constant 0 : index
    %0 = vector.load %arg1[%c0, %c0_0] : memref<8x6xf32, #tpu.memory_space<vmem>>, vector<8x6xf32>
    %c0_1 = arith.constant 0 : index
    %c0_2 = arith.constant 0 : index
    %1 = vector.load %arg2[%c0_1, %c0_2] : memref<6x128xf32, #tpu.memory_space<vmem>>, vector<6x128xf32>
    %cst = arith.constant dense<0.000000e+00> : vector<8x128xf32>
    %2 = tpu.matmul %0, %1, %cst {dimension_numbers = #tpu.dot_dimension_numbers<[1], [0], [0], [1], [0, 0, 1, 1], [], []>} : vector<8x6xf32>, vector<6x128xf32>, vector<8x128xf32> -> vector<8x128xf32>
    %c0_3 = arith.constant 0 : index
    %c0_4 = arith.constant 0 : index
    %3 = vector.load %arg5[%c0_3, %c0_4] : memref<4x128xf32, #tpu.memory_space<vmem>>, vector<1x128xf32>
    %4 = vector.broadcast %3 : vector<1x128xf32> to vector<8x128xf32>
    %5 = arith.addf %2, %4 : vector<8x128xf32>
    %cst_5 = arith.constant 0.000000e+00 : f32
    %6 = vector.broadcast %cst_5 : f32 to vector<8x128xf32>
    %7 = arith.maximumf %5, %6 : vector<8x128xf32>
    %8 = arith.truncf %7 : vector<8x128xf32> to vector<8x128xbf16>
    %c0_6 = arith.constant 0 : index
    %c0_7 = arith.constant 0 : index
    %c0_8 = arith.constant 0 : index
    %9 = vector.load %arg3[%c0_6, %c0_7, %c0_8] : memref<3x128x128xbf16, #tpu.memory_space<vmem>>, vector<1x128x128xbf16>
    %10 = vector.shape_cast %9 : vector<1x128x128xbf16> to vector<128x128xbf16>
    %cst_9 = arith.constant dense<0.000000e+00> : vector<8x128xf32>
    %11 = tpu.matmul %8, %10, %cst_9 {dimension_numbers = #tpu.dot_dimension_numbers<[1], [0], [0], [1], [0, 0, 1, 1], [], []>} : vector<8x128xbf16>, vector<128x128xbf16>, vector<8x128xf32> -> vector<8x128xf32>
    %c1 = arith.constant 1 : index
    %c0_10 = arith.constant 0 : index
    %12 = vector.load %arg5[%c1, %c0_10] : memref<4x128xf32, #tpu.memory_space<vmem>>, vector<1x128xf32>
    %13 = vector.broadcast %12 : vector<1x128xf32> to vector<8x128xf32>
    %14 = arith.addf %11, %13 : vector<8x128xf32>
    %cst_11 = arith.constant 0.000000e+00 : f32
    %15 = vector.broadcast %cst_11 : f32 to vector<8x128xf32>
    %16 = arith.maximumf %14, %15 : vector<8x128xf32>
    %17 = arith.truncf %16 : vector<8x128xf32> to vector<8x128xbf16>
    %c1_12 = arith.constant 1 : index
    %c0_13 = arith.constant 0 : index
    %c0_14 = arith.constant 0 : index
    %18 = vector.load %arg3[%c1_12, %c0_13, %c0_14] : memref<3x128x128xbf16, #tpu.memory_space<vmem>>, vector<1x128x128xbf16>
    %19 = vector.shape_cast %18 : vector<1x128x128xbf16> to vector<128x128xbf16>
    %cst_15 = arith.constant dense<0.000000e+00> : vector<8x128xf32>
    %20 = tpu.matmul %17, %19, %cst_15 {dimension_numbers = #tpu.dot_dimension_numbers<[1], [0], [0], [1], [0, 0, 1, 1], [], []>} : vector<8x128xbf16>, vector<128x128xbf16>, vector<8x128xf32> -> vector<8x128xf32>
    %c2 = arith.constant 2 : index
    %c0_16 = arith.constant 0 : index
    %21 = vector.load %arg5[%c2, %c0_16] : memref<4x128xf32, #tpu.memory_space<vmem>>, vector<1x128xf32>
    %22 = vector.broadcast %21 : vector<1x128xf32> to vector<8x128xf32>
    %23 = arith.addf %20, %22 : vector<8x128xf32>
    %cst_17 = arith.constant 0.000000e+00 : f32
    %24 = vector.broadcast %cst_17 : f32 to vector<8x128xf32>
    %25 = arith.maximumf %23, %24 : vector<8x128xf32>
    %26 = arith.truncf %25 : vector<8x128xf32> to vector<8x128xbf16>
    %c2_18 = arith.constant 2 : index
    %c0_19 = arith.constant 0 : index
    %c0_20 = arith.constant 0 : index
    %27 = vector.load %arg3[%c2_18, %c0_19, %c0_20] : memref<3x128x128xbf16, #tpu.memory_space<vmem>>, vector<1x128x128xbf16>
    %28 = vector.shape_cast %27 : vector<1x128x128xbf16> to vector<128x128xbf16>
    %cst_21 = arith.constant dense<0.000000e+00> : vector<8x128xf32>
    %29 = tpu.matmul %26, %28, %cst_21 {dimension_numbers = #tpu.dot_dimension_numbers<[1], [0], [0], [1], [0, 0, 1, 1], [], []>} : vector<8x128xbf16>, vector<128x128xbf16>, vector<8x128xf32> -> vector<8x128xf32>
    %c3 = arith.constant 3 : index
    %c0_22 = arith.constant 0 : index
    %30 = vector.load %arg5[%c3, %c0_22] : memref<4x128xf32, #tpu.memory_space<vmem>>, vector<1x128xf32>
    %31 = vector.broadcast %30 : vector<1x128xf32> to vector<8x128xf32>
    %32 = arith.addf %29, %31 : vector<8x128xf32>
    %cst_23 = arith.constant 0.000000e+00 : f32
    %33 = vector.broadcast %cst_23 : f32 to vector<8x128xf32>
    %34 = arith.maximumf %32, %33 : vector<8x128xf32>
    %35 = arith.truncf %34 : vector<8x128xf32> to vector<8x128xbf16>
    %c0_24 = arith.constant 0 : index
    %c0_25 = arith.constant 0 : index
    %36 = vector.load %arg4[%c0_24, %c0_25] : memref<128x8xbf16, #tpu.memory_space<vmem>>, vector<128x8xbf16>
    %cst_26 = arith.constant dense<0.000000e+00> : vector<8x8xf32>
    %37 = tpu.matmul %35, %36, %cst_26 {dimension_numbers = #tpu.dot_dimension_numbers<[1], [0], [0], [1], [0, 0, 1, 1], [], []>} : vector<8x128xbf16>, vector<128x8xbf16>, vector<8x8xf32> -> vector<8x8xf32>
    %c0_27 = arith.constant 0 : index
    %c0_28 = arith.constant 0 : index
    %38 = vector.load %arg6[%c0_27, %c0_28] : memref<1x8xf32, #tpu.memory_space<vmem>>, vector<1x8xf32>
    %39 = vector.broadcast %38 : vector<1x8xf32> to vector<8x8xf32>
    %40 = arith.addf %37, %39 : vector<8x8xf32>
    %c0_29 = arith.constant 0 : index
    %c0_30 = arith.constant 0 : index
    %41 = vector.load %arg7[%c0_29, %c0_30] : memref<8x8xf32, #tpu.memory_space<vmem>>, vector<8x8xf32>
    tpu.vector_store %arg7[%c0_29, %c0_30], %40 {strides = array<i32>} : memref<8x8xf32, #tpu.memory_space<vmem>>, vector<8x8xf32>,
    return
  }
  func.func @transform_0(%arg0: i32) -> (i32, i32) {
    %c0_i32 = arith.constant 0 : i32
    %c0_i32_0 = arith.constant 0 : i32
    return %arg0, %c0_i32 : i32, i32
  }
  func.func @transform_1(%arg0: i32) -> (i32, i32) {
    %c0_i32 = arith.constant 0 : i32
    %c0_i32_0 = arith.constant 0 : i32
    %c0_i32_1 = arith.constant 0 : i32
    return %c0_i32, %c0_i32_0 : i32, i32
  }
  func.func @transform_2(%arg0: i32) -> (i32, i32, i32) {
    %c0_i32 = arith.constant 0 : i32
    %c0_i32_0 = arith.constant 0 : i32
    %c0_i32_1 = arith.constant 0 : i32
    %c0_i32_2 = arith.constant 0 : i32
    return %c0_i32, %c0_i32_0, %c0_i32_1 : i32, i32, i32
  }
  func.func @transform_3(%arg0: i32) -> (i32, i32) {
    %c0_i32 = arith.constant 0 : i32
    %c0_i32_0 = arith.constant 0 : i32
    %c0_i32_1 = arith.constant 0 : i32
    return %c0_i32, %c0_i32_0 : i32, i32
  }
  func.func @transform_4(%arg0: i32) -> (i32, i32) {
    %c0_i32 = arith.constant 0 : i32
    %c0_i32_0 = arith.constant 0 : i32
    %c0_i32_1 = arith.constant 0 : i32
    return %c0_i32, %c0_i32_0 : i32, i32
  }
  func.func @transform_5(%arg0: i32) -> (i32, i32) {
    %c0_i32 = arith.constant 0 : i32
    %c0_i32_0 = arith.constant 0 : i32
    %c0_i32_1 = arith.constant 0 : i32
    return %c0_i32, %c0_i32_0 : i32, i32
  }
  func.func @transform_6(%arg0: i32) -> (i32, i32) {
    %c0_i32 = arith.constant 0 : i32
    %c0_i32_0 = arith.constant 0 : i32
    return %arg0, %c0_i32 : i32, i32
  }
}

</mosaic_0001>

<llo_original>
// kernel: tpu_custom_call.1
$region0: #{tpu_custom_call.1}
  #allocation0 [shape = 'u32[]', space=smem, size = 0x4, offset = 0x4, fixed_abs, tag = 'smem constant byte address 0x4 - core index']
  #allocation1 [shape = 'u32[72,128]{1,0:T(1,128)}', space=vmem, size = 0x9000, scoped, tag = 'internal scratch']
  %s0 = inlined_call_operand.vmem [shape: f32[8,6], index: 0, kind: input, shape index: {}]
  %s1 = inlined_call_operand.vmem [shape: f32[6,128], index: 1, kind: input, shape index: {}]
  %s2 = inlined_call_operand.hbm [shape: bf16[3,128,128], index: 2, kind: input, shape index: {}]
  %s3 = inlined_call_operand.vmem [shape: bf16[128,8], index: 3, kind: input, shape index: {}]
  %s4 = inlined_call_operand.vmem [shape: f32[4,128], index: 4, kind: input, shape index: {}]
  %s5 = inlined_call_operand.vmem [shape: f32[1,8], index: 5, kind: input, shape index: {}]
  %s6 = inlined_call_operand.hbm [shape: f32[8,8], index: 6, kind: output, shape index: {}]
  %s7 = sld [smem:[#allocation0]]
  $region38: #{tpu_custom_call.1} parent=0
    _
  %s9 = ssub.s32 1, %s7
  %s10 = scalar_select 0, %s9, %s7
  $region1: #{tpu_custom_call.1} parent=0
    #allocation2 [shape = 'u8[98304]{0}', space=vmem, size = 0x18000, scoped, tag = 'input window, operand 2, single buffered']
    #allocation3 [shape = 's32[1]{0}', space=sflag, size = 0x4, scoped, tag = 'scoped memory for tpu_custom_call.1']
    #allocation4 [shape = 's32[1]{0}', space=sflag, size = 0x4, scoped, tag = 'scoped memory for tpu_custom_call.1']
    #allocation5 [shape = 'u8[4096]{0}', space=vmem, size = 0x1000, scoped, tag = 'output window, operand 0, single buffered']
    %11 = vsyncpa [#allocation3], 0
    %12 = vsyncpa [#allocation4], 0
    // Predicated region
    $region2: #{tpu_custom_call.1} parent=1 // pred_check
      _
    $region3: #{tpu_custom_call.1} parent=1 // pred_check_branch
      %14 = sbr.rel (0) target = $region5
    $region4: #{tpu_custom_call.1} parent=1 // pred_region
      _
    $region5: #{tpu_custom_call.1} parent=1 // pred_fallthru
      _
    // Predicated region
    $region6: #{tpu_custom_call.1} parent=1 // pred_check
      _
    $region7: #{tpu_custom_call.1} parent=1 // pred_check_branch
      %16 = sbr.rel (0) target = $region9
    $region8: #{tpu_custom_call.1} parent=1 // pred_region
      _
    $region9: #{tpu_custom_call.1} parent=1 // pred_fallthru
      _
    // Predicated region
    $region10: #{tpu_custom_call.1} parent=1 // pred_check
      _
    $region11: #{tpu_custom_call.1} parent=1 // pred_check_branch
      %18 = sbr.rel (0) target = $region13
    $region12: #{tpu_custom_call.1} parent=1 // pred_region
      %20 = vsyncadd [#allocation3], 0
      %s21 = sshll.u32 %s2, 4
      %s22 = int_to_ptr.hbm [resolvable:$true] %s21
      %s23 = sshll.u32 [#allocation2], 4
      %s24 = int_to_ptr.vmem [resolvable:$true] %s23
      %29 = dma.hbm_to_vmem [thread:$0]  %s22, 3072, %s24, [#allocation3], 64, 64, 4
    $region13: #{tpu_custom_call.1} parent=1 // pred_fallthru
      _
    // Predicated region
    $region14: #{tpu_custom_call.1} parent=1 // pred_check
      _
    $region15: #{tpu_custom_call.1} parent=1 // pred_check_branch
      %31 = sbr.rel (0) target = $region17
    $region16: #{tpu_custom_call.1} parent=1 // pred_region
      _
    $region17: #{tpu_custom_call.1} parent=1 // pred_fallthru
      _
    // Predicated region
    $region18: #{tpu_custom_call.1} parent=1 // pred_check
      _
    $region19: #{tpu_custom_call.1} parent=1 // pred_check_branch
      %33 = sbr.rel (0) target = $region21
    $region20: #{tpu_custom_call.1} parent=1 // pred_region
      _
    $region21: #{tpu_custom_call.1} parent=1 // pred_fallthru
      _
    // Predicated region
    $region22: #{tpu_custom_call.1} parent=1 // pred_check
      _
    $region23: #{tpu_custom_call.1} parent=1 // pred_check_branch
      %35 = sbr.rel (0) target = $region25
    $region24: #{tpu_custom_call.1} parent=1 // pred_region
      _
    $region25: #{tpu_custom_call.1} parent=1 // pred_fallthru
      _
    // Predicated region
    $region26: #{tpu_custom_call.1} parent=1 // pred_check
      _
    $region27: #{tpu_custom_call.1} parent=1 // pred_check_branch
      %37 = sbr.rel (0) target = $region29
    $region28: #{tpu_custom_call.1} parent=1 // pred_region
      %39 = dma.done [#allocation3], 3072
    $region29: #{tpu_custom_call.1} parent=1 // pred_fallthru
      _
    %v40 = vld [vmem:[%s0] sm:$0xff]
    %v41 = vld [vmem:[%s1] sm:$0x3f]
    %v42 = vld [vmem:[%s4] sm:$0x1]
    %v43 = vperm.slane %v42, 0
    %vm44 = vcmask 48128
    %v46 = vsel %vm44, %v40, 0
    %vm48 = vcmask 1045504
    %v50 = vsel %vm48, %v41, 0
    %52 = vmatpush.msra.mxu0 0.0
    %53 = vmatpush.msra.mxu0 0.0
    %54 = vmatpush.msra.mxu0 0.0
    %55 = vmatpush.msra.mxu0 0.0
    %56 = vmatpush.msra.mxu0 0.0
    %57 = vmatpush.msra.mxu0 0.0
    %58 = vmatpush.msra.mxu0 0.0
    %59 = vmatpush.msra.mxu0 0.0
    %60 = vmatpush.msra.mxu0 0.0
    %61 = vmatpush.msra.mxu0 0.0
    %62 = vmatpush.msra.mxu0 0.0
    %63 = vmatpush.msra.mxu0 0.0
    %64 = vmatpush.msra.mxu0 0.0
    %65 = vmatpush.msra.mxu0 0.0
    %66 = vmatpush.msra.mxu0 0.0
    %67 = vmatpush.msra.mxu0 %v50
    %68 = vmatmul.f32.gmra.mxu0 %v46
    %v69 = vpop.f32.mrf.mxu0
    %v70 = vadd.f32 %v43, %v69
    %71 = vdwg.mxu0
    %v72 = vmax.f32 %v70, 0.0
    %v73 = vpack.c.bf16 %v72, %v72
    %v74 = vld [vmem:[#allocation2] sm:$0xf]
    %v75 = vld [vmem:[#allocation2 + $0x4] sm:$0xf]
    %v76 = vld [vmem:[#allocation2 + $0x8] sm:$0xf]
    %v77 = vld [vmem:[#allocation2 + $0xc] sm:$0xf]
    %v78 = vld [vmem:[#allocation2 + $0x10] sm:$0xf]
    %v79 = vld [vmem:[#allocation2 + $0x14] sm:$0xf]
    %v80 = vld [vmem:[#allocation2 + $0x18] sm:$0xf]
    %v81 = vld [vmem:[#allocation2 + $0x1c] sm:$0xf]
    %v82 = vld [vmem:[#allocation2 + $0x20] sm:$0xf]
    %v83 = vld [vmem:[#allocation2 + $0x24] sm:$0xf]
    %v84 = vld [vmem:[#allocation2 + $0x28] sm:$0xf]
    %v85 = vld [vmem:[#allocation2 + $0x2c] sm:$0xf]
    %v86 = vld [vmem:[#allocation2 + $0x30] sm:$0xf]
    %v87 = vld [vmem:[#allocation2 + $0x34] sm:$0xf]
    %v88 = vld [vmem:[#allocation2 + $0x38] sm:$0xf]
    %v89 = vld [vmem:[#allocation2 + $0x3c] sm:$0xf]
    %v90 = vld [vmem:[%s4 + $0x1] sm:$0x1]
    %v91 = vperm.slane %v90, 0
    %v108 = vunpack.c.l.b16 %v74
    %v109 = vunpack.c.l.b16 %v75
    %v110 = vunpack.c.l.b16 %v76
    %v111 = vunpack.c.l.b16 %v77
    %v112 = vunpack.c.l.b16 %v78
    %v113 = vunpack.c.l.b16 %v79
    %v114 = vunpack.c.l.b16 %v80
    %v115 = vunpack.c.l.b16 %v81
    %v116 = vunpack.c.l.b16 %v82
    %v117 = vunpack.c.l.b16 %v83
    %v118 = vunpack.c.l.b16 %v84
    %v119 = vunpack.c.l.b16 %v85
    %v120 = vunpack.c.l.b16 %v86
    %v121 = vunpack.c.l.b16 %v87
    %v122 = vunpack.c.l.b16 %v88
    %v123 = vunpack.c.l.b16 %v89
    %v124 = vpack.c.b16 %v109, %v108
    %v125 = vpack.c.b16 %v111, %v110
    %v126 = vpack.c.b16 %v113, %v112
    %v127 = vpack.c.b16 %v115, %v114
    %v128 = vpack.c.b16 %v117, %v116
    %v129 = vpack.c.b16 %v119, %v118
    %v130 = vpack.c.b16 %v121, %v120
    %v131 = vpack.c.b16 %v123, %v122
    %140 = vmatpush.bf16.msra.mxu0 %v131
    %141 = vmatpush.bf16.msra.mxu0 %v130
    %142 = vmatpush.bf16.msra.mxu0 %v129
    %143 = vmatpush.bf16.msra.mxu0 %v128
    %144 = vmatpush.bf16.msra.mxu0 %v127
    %145 = vmatpush.bf16.msra.mxu0 %v126
    %146 = vmatpush.bf16.msra.mxu0 %v125
    %147 = vmatpush.bf16.msra.mxu0 %v124
    %148 = vmatmul.bf16.gmra.mxu0 %v73
    %v149 = vpop.f32.mrf.mxu0
    %v150 = vadd.f32 %v91, %v149
    %v151 = vpop.f32.mrf.mxu0
    %152 = vdwg.mxu0
    %v153 = vmax.f32 %v150, 0.0
    %v154 = vpack.c.bf16 %v153, %v153
    %s155 = scalar_lea.vmem [#allocation2], 64
    %v156 = vld [vmem:[%s155] sm:$0xf]
    %v157 = vld [vmem:[%s155 + $0x4] sm:$0xf]
    %v158 = vld [vmem:[%s155 + $0x8] sm:$0xf]
    %v159 = vld [vmem:[%s155 + $0xc] sm:$0xf]
    %v160 = vld [vmem:[%s155 + $0x10] sm:$0xf]
    %v161 = vld [vmem:[%s155 + $0x14] sm:$0xf]
    %v162 = vld [vmem:[%s155 + $0x18] sm:$0xf]
    %v163 = vld [vmem:[%s155 + $0x1c] sm:$0xf]
    %v164 = vld [vmem:[%s155 + $0x20] sm:$0xf]
    %v165 = vld [vmem:[%s155 + $0x24] sm:$0xf]
    %v166 = vld [vmem:[%s155 + $0x28] sm:$0xf]
    %v167 = vld [vmem:[%s155 + $0x2c] sm:$0xf]
    %v168 = vld [vmem:[%s155 + $0x30] sm:$0xf]
    %v169 = vld [vmem:[%s155 + $0x34] sm:$0xf]
    %v170 = vld [vmem:[%s155 + $0x38] sm:$0xf]
    %v171 = vld [vmem:[%s155 + $0x3c] sm:$0xf]
    %v172 = vld [vmem:[%s4 + $0x2] sm:$0x1]
    %v173 = vperm.slane %v172, 0
    %v190 = vunpack.c.l.b16 %v156
    %v191 = vunpack.c.l.b16 %v157
    %v192 = vunpack.c.l.b16 %v158
    %v193 = vunpack.c.l.b16 %v159
    %v194 = vunpack.c.l.b16 %v160
    %v195 = vunpack.c.l.b16 %v161
    %v196 = vunpack.c.l.b16 %v162
    %v197 = vunpack.c.l.b16 %v163
    %v198 = vunpack.c.l.b16 %v164
    %v199 = vunpack.c.l.b16 %v165
    %v200 = vunpack.c.l.b16 %v166
    %v201 = vunpack.c.l.b16 %v167
    %v202 = vunpack.c.l.b16 %v168
    %v203 = vunpack.c.l.b16 %v169
    %v204 = vunpack.c.l.b16 %v170
    %v205 = vunpack.c.l.b16 %v171
    %v206 = vpack.c.b16 %v191, %v190
    %v207 = vpack.c.b16 %v193, %v192
    %v208 = vpack.c.b16 %v195, %v194
    %v209 = vpack.c.b16 %v197, %v196
    %v210 = vpack.c.b16 %v199, %v198
    %v211 = vpack.c.b16 %v201, %v200
    %v212 = vpack.c.b16 %v203, %v202
    %v213 = vpack.c.b16 %v205, %v204
    %222 = vmatpush.bf16.msra.mxu0 %v213
    %223 = vmatpush.bf16.msra.mxu0 %v212
    %224 = vmatpush.bf16.msra.mxu0 %v211
    %225 = vmatpush.bf16.msra.mxu0 %v210
    %226 = vmatpush.bf16.msra.mxu0 %v209
    %227 = vmatpush.bf16.msra.mxu0 %v208
    %228 = vmatpush.bf16.msra.mxu0 %v207
    %229 = vmatpush.bf16.msra.mxu0 %v206
    %230 = vmatmul.bf16.gmra.mxu0 %v154
    %v231 = vpop.f32.mrf.mxu0
    %v232 = vadd.f32 %v173, %v231
    %v233 = vpop.f32.mrf.mxu0
    %234 = vdwg.mxu0
    %v235 = vmax.f32 %v232, 0.0
    %v236 = vpack.c.bf16 %v235, %v235
    %s237 = scalar_lea.vmem [#allocation2], 128
    %v238 = vld [vmem:[%s237] sm:$0xf]
    %v239 = vld [vmem:[%s237 + $0x4] sm:$0xf]
    %v240 = vld [vmem:[%s237 + $0x8] sm:$0xf]
    %v241 = vld [vmem:[%s237 + $0xc] sm:$0xf]
    %v242 = vld [vmem:[%s237 + $0x10] sm:$0xf]
    %v243 = vld [vmem:[%s237 + $0x14] sm:$0xf]
    %v244 = vld [vmem:[%s237 + $0x18] sm:$0xf]
    %v245 = vld [vmem:[%s237 + $0x1c] sm:$0xf]
    %v246 = vld [vmem:[%s237 + $0x20] sm:$0xf]
    %v247 = vld [vmem:[%s237 + $0x24] sm:$0xf]
    %v248 = vld [vmem:[%s237 + $0x28] sm:$0xf]
    %v249 = vld [vmem:[%s237 + $0x2c] sm:$0xf]
    %v250 = vld [vmem:[%s237 + $0x30] sm:$0xf]
    %v251 = vld [vmem:[%s237 + $0x34] sm:$0xf]
    %v252 = vld [vmem:[%s237 + $0x38] sm:$0xf]
    %v253 = vld [vmem:[%s237 + $0x3c] sm:$0xf]
    %v254 = vld [vmem:[%s4 + $0x3] sm:$0x1]
    %v255 = vperm.slane %v254, 0
    %v272 = vunpack.c.l.b16 %v238
    %v273 = vunpack.c.l.b16 %v239
    %v274 = vunpack.c.l.b16 %v240
    %v275 = vunpack.c.l.b16 %v241
    %v276 = vunpack.c.l.b16 %v242
    %v277 = vunpack.c.l.b16 %v243
    %v278 = vunpack.c.l.b16 %v244
    %v279 = vunpack.c.l.b16 %v245
    %v280 = vunpack.c.l.b16 %v246
    %v281 = vunpack.c.l.b16 %v247
    %v282 = vunpack.c.l.b16 %v248
    %v283 = vunpack.c.l.b16 %v249
    %v284 = vunpack.c.l.b16 %v250
    %v285 = vunpack.c.l.b16 %v251
    %v286 = vunpack.c.l.b16 %v252
    %v287 = vunpack.c.l.b16 %v253
    %v288 = vpack.c.b16 %v273, %v272
    %v289 = vpack.c.b16 %v275, %v274
    %v290 = vpack.c.b16 %v277, %v276
    %v291 = vpack.c.b16 %v279, %v278
    %v292 = vpack.c.b16 %v281, %v280
    %v293 = vpack.c.b16 %v283, %v282
    %v294 = vpack.c.b16 %v285, %v284
    %v295 = vpack.c.b16 %v287, %v286
    %304 = vmatpush.bf16.msra.mxu0 %v295
    %305 = vmatpush.bf16.msra.mxu0 %v294
    %306 = vmatpush.bf16.msra.mxu0 %v293
    %307 = vmatpush.bf16.msra.mxu0 %v292
    %308 = vmatpush.bf16.msra.mxu0 %v291
    %309 = vmatpush.bf16.msra.mxu0 %v290
    %310 = vmatpush.bf16.msra.mxu0 %v289
    %311 = vmatpush.bf16.msra.mxu0 %v288
    %312 = vmatmul.bf16.gmra.mxu0 %v236
    %v313 = vpop.f32.mrf.mxu0
    %v314 = vadd.f32 %v255, %v313
    %v315 = vpop.f32.mrf.mxu0
    %316 = vdwg.mxu0
    %v317 = vmax.f32 %v314, 0.0
    %v318 = vpack.c.bf16 %v317, %v317
    %v319 = vld [vmem:[%s3] sm:$0xf]
    %v320 = vld [vmem:[%s3 + $0x4] sm:$0xf]
    %v321 = vld [vmem:[%s3 + $0x8] sm:$0xf]
    %v322 = vld [vmem:[%s3 + $0xc] sm:$0xf]
    %v323 = vld [vmem:[%s3 + $0x10] sm:$0xf]
    %v324 = vld [vmem:[%s3 + $0x14] sm:$0xf]
    %v325 = vld [vmem:[%s3 + $0x18] sm:$0xf]
    %v326 = vld [vmem:[%s3 + $0x1c] sm:$0xf]
    %v327 = vld [vmem:[%s3 + $0x20] sm:$0xf]
    %v328 = vld [vmem:[%s3 + $0x24] sm:$0xf]
    %v329 = vld [vmem:[%s3 + $0x28] sm:$0xf]
    %v330 = vld [vmem:[%s3 + $0x2c] sm:$0xf]
    %v331 = vld [vmem:[%s3 + $0x30] sm:$0xf]
    %v332 = vld [vmem:[%s3 + $0x34] sm:$0xf]
    %v333 = vld [vmem:[%s3 + $0x38] sm:$0xf]
    %v334 = vld [vmem:[%s3 + $0x3c] sm:$0xf]
    %v335 = vld [vmem:[%s5] sm:$0x1]
    %v337 = vperm.slane %v335, 0
    %v355 = vunpack.c.l.b16 %v319
    %v356 = vunpack.c.l.b16 %v320
    %v357 = vunpack.c.l.b16 %v321
    %v358 = vunpack.c.l.b16 %v322
    %v359 = vunpack.c.l.b16 %v323
    %v360 = vunpack.c.l.b16 %v324
    %v361 = vunpack.c.l.b16 %v325
    %v362 = vunpack.c.l.b16 %v326
    %v363 = vunpack.c.l.b16 %v327
    %v364 = vunpack.c.l.b16 %v328
    %v365 = vunpack.c.l.b16 %v329
    %v366 = vunpack.c.l.b16 %v330
    %v367 = vunpack.c.l.b16 %v331
    %v368 = vunpack.c.l.b16 %v332
    %v369 = vunpack.c.l.b16 %v333
    %v370 = vunpack.c.l.b16 %v334
    %v371 = vpack.c.b16 %v356, %v355
    %v372 = vpack.c.b16 %v358, %v357
    %v373 = vpack.c.b16 %v360, %v359
    %v374 = vpack.c.b16 %v362, %v361
    %v375 = vpack.c.b16 %v364, %v363
    %v376 = vpack.c.b16 %v366, %v365
    %v377 = vpack.c.b16 %v368, %v367
    %v378 = vpack.c.b16 %v370, %v369
    %387 = vmatpush.bf16.msra.mxu0 %v378
    %388 = vmatpush.bf16.msra.mxu0 %v377
    %389 = vmatpush.bf16.msra.mxu0 %v376
    %390 = vmatpush.bf16.msra.mxu0 %v375
    %391 = vmatpush.bf16.msra.mxu0 %v374
    %392 = vmatpush.bf16.msra.mxu0 %v373
    %393 = vmatpush.bf16.msra.mxu0 %v372
    %394 = vmatpush.bf16.msra.mxu0 %v371
    %395 = vmatmul.bf16.gmra.mxu0 %v318
    %v396 = vpop.f32.mrf.mxu0
    %v397 = vadd.f32 %v337, %v396
    %v398 = vpop.f32.mrf.mxu0
    %399 = vdwg.mxu0
    %vm400 = vcmask 64512
    %401 = vst.msk [vmem:[#allocation5] sm:$0xff] %vm400, %v397
    // Predicated region
    $region30: #{tpu_custom_call.1} parent=1 // pred_check
      _
    $region31: #{tpu_custom_call.1} parent=1 // pred_check_branch
      %403 = sbr.rel (0) target = $region33
    $region32: #{tpu_custom_call.1} parent=1 // pred_region
      %405 = vsyncadd [#allocation4], 0
      %s407 = sshll.u32 [#allocation5], 4
      %s408 = int_to_ptr.vmem [resolvable:$true] %s407
      %s409 = sshll.u32 %s6, 4
      %s410 = int_to_ptr.hbm [resolvable:$true] %s409
      %412 = dma.vmem_to_hbm [thread:$0]  %s408, 128, %s410, [#allocation4]
    $region33: #{tpu_custom_call.1} parent=1 // pred_fallthru
      _
    // Predicated region
    $region34: #{tpu_custom_call.1} parent=1 // pred_check
      _
    $region35: #{tpu_custom_call.1} parent=1 // pred_check_branch
      %414 = sbr.rel (0) target = $region37
    $region36: #{tpu_custom_call.1} parent=1 // pred_region
      %416 = dma.done [#allocation4], 128
    $region37: #{tpu_custom_call.1} parent=1 // pred_fallthru
      _
    %417 = vsyncpa [#allocation3], 1
    %418 = vsyncpa [#allocation4], 1

</llo_original>
